<compile_context>
chip_gen: v7x
topology: tpu7x:2x2x1
jax: 0.10.0
libtpu: 0.0.40
codegen_flags: <defaults>
</compile_context>

<pallas_src>
import functools

import jax
import jax.numpy as jnp
from jax.experimental import pallas as pl
from jax.experimental.pallas import tpu as pltpu


_PAD_LABEL = int(jnp.iinfo(jnp.int32).min)  # assumes real labels never use INT32_MIN
_LANE = 128


def _triplet_kernel(x_row_ref, xt_col_ref, sqh_col_ref, t_row_ref, t_col_ref,
                    hinge_ref, ap_ref, an_ref, *, margin):
    j = pl.program_id(1)

    @pl.when(j == 0)
    def _init():
        ap_ref[...] = jnp.full(ap_ref.shape, -jnp.inf, jnp.float32)
        an_ref[...] = jnp.full(an_ref.shape, jnp.inf, jnp.float32)

    # gram[i, j] = <x_i, x_j>.  Plain (M,K)x(K,N): column operand is pre-transposed
    # in the wrapper, so no per-step XLU transpose.  Operands arrive already in the
    # gram dtype (bf16 by default) -> native MXU, f32 accumulation.
    gram = jnp.dot(x_row_ref[...], xt_col_ref[...],
                   preferred_element_type=jnp.float32)             # (TM, TN) f32

    # dist' = 0.5*||x_j||^2 - <x_i, x_j>.
    #   * per-row ||x_i||^2 cancels in dist_ap - dist_an -> dropped
    #   * global factor 2 applied once at finalize (exact rescale)
    #   * padded columns: sqh = +inf  -> never win the negative min,
    #     sentinel label              -> never enter the positive max.
    dist = sqh_col_ref[...] - gram                                 # (TM, TN)

    same = t_row_ref[...] == t_col_ref[...]                        # (TM, TN)
    ap_cand = jnp.where(same, dist, -jnp.inf)
    an_cand = jnp.where(same, jnp.inf, dist)

    # Lane-chunked VPU max/min accumulation into (TM, 128) scratch; the cross-lane
    # (XLU) reduction runs once per row tile at finalize, not per grid step.
    ap_acc = ap_ref[...]
    an_acc = an_ref[...]
    tn_blk = dist.shape[1]
    for c in range(tn_blk // _LANE):
        sl = slice(c * _LANE, (c + 1) * _LANE)
        ap_acc = jnp.maximum(ap_acc, ap_cand[:, sl])
        an_acc = jnp.minimum(an_acc, an_cand[:, sl])
    ap_ref[...] = ap_acc
    an_ref[...] = an_acc

    @pl.when(j == pl.num_programs(1) - 1)
    def _finalize():
        ap = jnp.max(ap_ref[...], axis=1, keepdims=True)           # (TM, 1)
        an = jnp.min(an_ref[...], axis=1, keepdims=True)
        hinge_ref[...] = jnp.maximum(2.0 * (ap - an) + jnp.float32(margin), 0.0)


def _round_up(v, m):
    return ((v + m - 1) // m) * m


def _pick_tile(total, target):
    t = min(total, target)
    while total % t:
        t //= 2
    return t


def _physical_vmem_bytes():
    try:
        info = pltpu.get_tpu_info()
        for attr in ("vmem_capacity_bytes", "vmem_bytes", "vmem_size_bytes"):
            v = getattr(info, attr, None)
            if v:
                return int(v)
    except Exception:
        pass
    return 64 * 1024 * 1024  # conservative (v7x-sized) fallback


def _est_vmem_bytes(tm, tn, d_pad, x_itemsize):
    blocks = 2 * x_itemsize * (tm + tn) * d_pad      # double-buffered x row/col blocks
    small = 2 * 4 * (3 * tm + 2 * tn)                # labels / norms / hinge blocks
    scratch = 2 * tm * _LANE * 4                     # running max / min accumulators
    temps = 6 * tm * tn * 4                          # gram / dist / mask / candidates
    return blocks + small + scratch + temps


def triplet_loss(inputs, targets, margin=200.0, *, block_m=512, block_n=256,
                 gram_dtype=jnp.bfloat16):
    """Hard-mining triplet loss. inputs: (N, D) float, targets: (N,) int -> scalar f32.

    gram_dtype=jnp.bfloat16 (default) runs the Gram matmul at the MXU's native rate on
    all TPU generations and halves the streamed HBM traffic; pass jnp.float32 for a
    bit-closer match to the f32 reference.
    """
    n, d = inputs.shape
    x = inputs.astype(jnp.float32)
    t = targets.astype(jnp.int32)

    # Pad to lane/sublane-friendly multiples of 128.
    n_pad = _round_up(n, 128)
    d_pad = _round_up(d, 128)
    x_pad = jnp.pad(x, ((0, n_pad - n), (0, d_pad - d)))
    t_pad = jnp.pad(t, (0, n_pad - n), constant_values=_PAD_LABEL)

    # 0.5*||x_j||^2, lane-dense; +inf on padded columns so they never win the
    # negative min (their sentinel label keeps them out of the positive max).
    sq = jnp.sum(x_pad * x_pad, axis=1)
    col_real = jnp.arange(n_pad) < n
    sqh_col = jnp.where(col_real, 0.5 * sq, jnp.inf).reshape(1, n_pad).astype(jnp.float32)

    t_row = t_pad.reshape(n_pad, 1)
    t_col = t_pad.reshape(1, n_pad)

    # MXU operands cast once here (no per-step in-kernel cast); column operand is
    # pre-transposed so the kernel matmul is a plain (M,K)x(K,N).
    x_c = x_pad.astype(gram_dtype)            # (n_pad, d_pad)
    xt_c = x_c.T                               # (d_pad, n_pad)

    # Tile selection: tall row tiles (arithmetic intensity of the streamed column block
    # scales with tm), modest column tiles; keep >= 2 row tiles when possible so the
    # "parallel" row axis can shard across both v7x TensorCores.
    eff_block_m = min(block_m, n_pad // 2) if n_pad >= 256 else block_m
    tm = _pick_tile(n_pad, max(eff_block_m, 128))
    tn = _pick_tile(n_pad, max(block_n, 128))

    # Generation-aware VMEM budget (v5e/v6e: 128 MiB, v7x: 64 MiB physical); shrink
    # tiles if the double-buffered working set would not leave compiler headroom.
    x_itemsize = jnp.dtype(gram_dtype).itemsize
    vmem_cap = int(_physical_vmem_bytes() * 0.78)
    while (_est_vmem_bytes(tm, tn, d_pad, x_itemsize) > 0.7 * vmem_cap
           and (tm > 128 or tn > 128)):
        if tn > 128:
            tn //= 2
        else:
            tm //= 2
    # For extreme D a K-axis grid with a (tm, tn) gram accumulator would beat shrinking
    # tiles; typical re-ID feature dims (<= 4K) never hit that regime.

    est = _est_vmem_bytes(tm, tn, d_pad, x_itemsize)
    vmem_limit = int(min(vmem_cap, max(2 * est, 32 * 1024 * 1024)))

    grid = (n_pad // tm, n_pad // tn)
    kernel = functools.partial(_triplet_kernel, margin=float(margin))

    hinge = pl.pallas_call(
        kernel,
        out_shape=jax.ShapeDtypeStruct((n_pad, 1), jnp.float32),
        grid_spec=pltpu.PrefetchScalarGridSpec(
            num_scalar_prefetch=0,
            grid=grid,
            in_specs=[
                pl.BlockSpec((tm, d_pad), lambda i, j: (i, 0)),   # x rows (gram_dtype)
                pl.BlockSpec((d_pad, tn), lambda i, j: (0, j)),   # x cols, pre-transposed
                pl.BlockSpec((1, tn), lambda i, j: (0, j)),       # 0.5*||x_j||^2 (+inf pad)
                pl.BlockSpec((tm, 1), lambda i, j: (i, 0)),       # row labels
                pl.BlockSpec((1, tn), lambda i, j: (0, j)),       # col labels (lane-dense)
            ],
            out_specs=pl.BlockSpec((tm, 1), lambda i, j: (i, 0)),
            scratch_shapes=[
                pltpu.VMEM((tm, _LANE), jnp.float32),   # running hard-positive max
                pltpu.VMEM((tm, _LANE), jnp.float32),   # running hard-negative min
            ],
        ),
        compiler_params=pltpu.CompilerParams(
            dimension_semantics=("parallel", "arbitrary"),
            vmem_limit_bytes=vmem_limit,
        ),
    )(x_c, xt_c, sqh_col, t_row, t_col)

    # Padded rows may carry +inf hinge; they are sliced out before the mean.
    return jnp.sum(hinge[:n, 0]) / jnp.float32(n)


def _reference_triplet_loss(inputs, targets, margin=200.0):
    # Pure-JAX reference mirroring the PyTorch forward (default branch).
    x = inputs.astype(jnp.float32)
    sq = jnp.sum(x * x, axis=1, keepdims=True)
    dist = sq + sq.T - 2.0 * (x @ x.T)
    mask = targets[:, None] == targets[None, :]
    dist_ap = jnp.max(jnp.where(mask, dist, -jnp.inf), axis=1)
    dist_an = jnp.min(jnp.where(mask, jnp.inf, dist), axis=1)
    return jnp.mean(jnp.maximum(dist_ap - dist_an + margin, 0.0))


if __name__ == "__main__":
    key = jax.random.PRNGKey(0)

    # Small demo consistent with the module: 8 samples, 32-dim features,
    # 4 identities x 2 samples each (every row has a positive and a negative).
    n, d = 8, 32
    kx, k2 = jax.random.split(key)
    inputs = jax.random.normal(kx, (n, d), dtype=jnp.float32)
    targets = jnp.array([0, 0, 1, 1, 2, 2, 3, 3], dtype=jnp.int32)

    ref = _reference_triplet_loss(inputs, targets, margin=200.0)

    # Default bf16 gram path (native MXU; tolerance loosened accordingly).
    loss_bf16 = triplet_loss(inputs, targets, margin=200.0)
    jax.block_until_ready(loss_bf16)
    assert jnp.allclose(loss_bf16, ref, rtol=1e-2, atol=1.0), (loss_bf16, ref)

    # f32 gram path matches the reference tightly.
    loss_f32 = triplet_loss(inputs, targets, margin=200.0, gram_dtype=jnp.float32)
    jax.block_until_ready(loss_f32)
    assert jnp.allclose(loss_f32, ref, rtol=1e-4, atol=1e-3), (loss_f32, ref)

    # Larger check exercising the multi-tile grid and the online max/min
    # accumulators across column tiles (grid = (2, 2)).
    n2, d2 = 256, 160
    ka, kb = jax.random.split(k2)
    inputs2 = jax.random.normal(ka, (n2, d2), dtype=jnp.float32)
    targets2 = jax.random.randint(kb, (n2,), 0, 8, dtype=jnp.int32)
    ref2 = _reference_triplet_loss(inputs2, targets2, margin=200.0)

    loss2 = triplet_loss(inputs2, targets2, margin=200.0, block_m=128, block_n=128)
    jax.block_until_ready(loss2)
    assert jnp.allclose(loss2, ref2, rtol=2e-2, atol=0.5), (loss2, ref2)

    # Default tile config (tn=256 -> two lane chunks per step; grid = (2, 1)).
    loss3 = triplet_loss(inputs2, targets2, margin=200.0)
    jax.block_until_ready(loss3)
    assert jnp.allclose(loss3, ref2, rtol=2e-2, atol=0.5), (loss3, ref2)

    print("KERNEL_OK")
</pallas_src>

<mosaic_0001>
module attributes {stable_mosaic.version = 11 : i64} {
  func.func @_triplet_kernel(%arg0: i32, %arg1: i32, %arg2: memref<128x128xbf16, #tpu.memory_space<vmem>>, %arg3: memref<128x128xbf16, #tpu.memory_space<vmem>>, %arg4: memref<1x128xf32, #tpu.memory_space<vmem>>, %arg5: memref<128x1xi32, #tpu.memory_space<vmem>>, %arg6: memref<1x128xi32, #tpu.memory_space<vmem>>, %arg7: memref<128x1xf32, #tpu.memory_space<vmem>>, %arg8: memref<128x128xf32, #tpu.memory_space<vmem>>, %arg9: memref<128x128xf32, #tpu.memory_space<vmem>>) attributes {dimension_semantics = [#tpu.dimension_semantics<parallel>, #tpu.dimension_semantics<arbitrary>], iteration_bounds = array<i64: 1, 1>, scalar_prefetch = 0 : i64, scratch_operands = 2 : i64, tpu.core_type = #tpu.core_type<tc>, window_params = [{transform_indices = @transform_0, window_bounds = array<i64: 128, 128>}, {transform_indices = @transform_1, window_bounds = array<i64: 128, 128>}, {transform_indices = @transform_2, window_bounds = array<i64: 1, 128>}, {transform_indices = @transform_3, window_bounds = array<i64: 128, 1>}, {transform_indices = @transform_4, window_bounds = array<i64: 1, 128>}, {transform_indices = @transform_5, window_bounds = array<i64: 128, 1>}]} {
    %c0_i32 = arith.constant 0 : i32
    %0 = arith.cmpi eq, %arg1, %c0_i32 : i32
    %1 = arith.extui %0 : i1 to i32
    %c0_i32_0 = arith.constant 0 : i32
    %2 = arith.cmpi ne, %1, %c0_i32_0 : i32
    scf.if %2 {
      %cst_22 = arith.constant 0xFF800000 : f32
      %27 = vector.broadcast %cst_22 : f32 to vector<128x128xf32>
      %c0_23 = arith.constant 0 : index
      %c0_24 = arith.constant 0 : index
      %28 = vector.load %arg8[%c0_23, %c0_24] : memref<128x128xf32, #tpu.memory_space<vmem>>, vector<128x128xf32>
      tpu.vector_store %arg8[%c0_23, %c0_24], %27 {strides = array<i32>} : memref<128x128xf32, #tpu.memory_space<vmem>>, vector<128x128xf32>,
      %cst_25 = arith.constant 0x7F800000 : f32
      %29 = vector.broadcast %cst_25 : f32 to vector<128x128xf32>
      %c0_26 = arith.constant 0 : index
      %c0_27 = arith.constant 0 : index
      %30 = vector.load %arg9[%c0_26, %c0_27] : memref<128x128xf32, #tpu.memory_space<vmem>>, vector<128x128xf32>
      tpu.vector_store %arg9[%c0_26, %c0_27], %29 {strides = array<i32>} : memref<128x128xf32, #tpu.memory_space<vmem>>, vector<128x128xf32>,
    } else {
    }
    %c0 = arith.constant 0 : index
    %c0_1 = arith.constant 0 : index
    %3 = vector.load %arg2[%c0, %c0_1] : memref<128x128xbf16, #tpu.memory_space<vmem>>, vector<128x128xbf16>
    %c0_2 = arith.constant 0 : index
    %c0_3 = arith.constant 0 : index
    %4 = vector.load %arg3[%c0_2, %c0_3] : memref<128x128xbf16, #tpu.memory_space<vmem>>, vector<128x128xbf16>
    %cst = arith.constant dense<0.000000e+00> : vector<128x128xf32>
    %5 = tpu.matmul %3, %4, %cst {dimension_numbers = #tpu.dot_dimension_numbers<[1], [0], [0], [1], [0, 0, 1, 1], [], []>} : vector<128x128xbf16>, vector<128x128xbf16>, vector<128x128xf32> -> vector<128x128xf32>
    %c0_4 = arith.constant 0 : index
    %c0_5 = arith.constant 0 : index
    %6 = vector.load %arg4[%c0_4, %c0_5] : memref<1x128xf32, #tpu.memory_space<vmem>>, vector<1x128xf32>
    %7 = vector.broadcast %6 : vector<1x128xf32> to vector<128x128xf32>
    %8 = arith.subf %7, %5 : vector<128x128xf32>
    %c0_6 = arith.constant 0 : index
    %c0_7 = arith.constant 0 : index
    %9 = vector.load %arg5[%c0_6, %c0_7] : memref<128x1xi32, #tpu.memory_space<vmem>>, vector<128x1xi32>
    %c0_8 = arith.constant 0 : index
    %c0_9 = arith.constant 0 : index
    %10 = vector.load %arg6[%c0_8, %c0_9] : memref<1x128xi32, #tpu.memory_space<vmem>>, vector<1x128xi32>
    %11 = vector.broadcast %9 : vector<128x1xi32> to vector<128x128xi32>
    %12 = vector.broadcast %10 : vector<1x128xi32> to vector<128x128xi32>
    %13 = arith.cmpi eq, %11, %12 : vector<128x128xi32>
    %cst_10 = arith.constant 0xFF800000 : f32
    %14 = vector.broadcast %cst_10 : f32 to vector<128x128xf32>
    %15 = arith.select %13, %8, %14 : vector<128x128xi1>, vector<128x128xf32>
    %cst_11 = arith.constant 0x7F800000 : f32
    %16 = vector.broadcast %cst_11 : f32 to vector<128x128xf32>
    %17 = arith.select %13, %16, %8 : vector<128x128xi1>, vector<128x128xf32>
    %c0_12 = arith.constant 0 : index
    %c0_13 = arith.constant 0 : index
    %18 = vector.load %arg8[%c0_12, %c0_13] : memref<128x128xf32, #tpu.memory_space<vmem>>, vector<128x128xf32>
    %c0_14 = arith.constant 0 : index
    %c0_15 = arith.constant 0 : index
    %19 = vector.load %arg9[%c0_14, %c0_15] : memref<128x128xf32, #tpu.memory_space<vmem>>, vector<128x128xf32>
    %20 = arith.maximumf %18, %15 : vector<128x128xf32>
    %21 = arith.minimumf %19, %17 : vector<128x128xf32>
    %c0_16 = arith.constant 0 : index
    %c0_17 = arith.constant 0 : index
    %22 = vector.load %arg8[%c0_16, %c0_17] : memref<128x128xf32, #tpu.memory_space<vmem>>, vector<128x128xf32>
    tpu.vector_store %arg8[%c0_16, %c0_17], %20 {strides = array<i32>} : memref<128x128xf32, #tpu.memory_space<vmem>>, vector<128x128xf32>,
    %c0_18 = arith.constant 0 : index
    %c0_19 = arith.constant 0 : index
    %23 = vector.load %arg9[%c0_18, %c0_19] : memref<128x128xf32, #tpu.memory_space<vmem>>, vector<128x128xf32>
    tpu.vector_store %arg9[%c0_18, %c0_19], %21 {strides = array<i32>} : memref<128x128xf32, #tpu.memory_space<vmem>>, vector<128x128xf32>,
    %c0_i32_20 = arith.constant 0 : i32
    %24 = arith.cmpi eq, %arg1, %c0_i32_20 : i32
    %25 = arith.extui %24 : i1 to i32
    %c0_i32_21 = arith.constant 0 : i32
    %26 = arith.cmpi ne, %25, %c0_i32_21 : i32
    scf.if %26 {
      %c0_22 = arith.constant 0 : index
      %c0_23 = arith.constant 0 : index
      %27 = vector.load %arg8[%c0_22, %c0_23] : memref<128x128xf32, #tpu.memory_space<vmem>>, vector<128x128xf32>
      %cst_24 = arith.constant dense<0xFF800000> : vector<128xf32>
      %28 = vector.multi_reduction <maximumf>, %27, %cst_24 [1] : vector<128x128xf32> to vector<128xf32>
      %29 = vector.shape_cast %28 : vector<128xf32> to vector<128x1xf32>
      %c0_25 = arith.constant 0 : index
      %c0_26 = arith.constant 0 : index
      %30 = vector.load %arg9[%c0_25, %c0_26] : memref<128x128xf32, #tpu.memory_space<vmem>>, vector<128x128xf32>
      %cst_27 = arith.constant dense<0x7F800000> : vector<128xf32>
      %31 = vector.multi_reduction <minimumf>, %30, %cst_27 [1] : vector<128x128xf32> to vector<128xf32>
      %32 = vector.shape_cast %31 : vector<128xf32> to vector<128x1xf32>
      %33 = arith.subf %29, %32 : vector<128x1xf32>
      %cst_28 = arith.constant 2.000000e+00 : f32
      %34 = vector.broadcast %cst_28 : f32 to vector<128x1xf32>
      %35 = arith.mulf %34, %33 : vector<128x1xf32>
      %cst_29 = arith.constant 2.000000e+02 : f32
      %36 = vector.broadcast %cst_29 : f32 to vector<128x1xf32>
      %37 = arith.addf %35, %36 : vector<128x1xf32>
      %cst_30 = arith.constant 0.000000e+00 : f32
      %38 = vector.broadcast %cst_30 : f32 to vector<128x1xf32>
      %39 = arith.maximumf %37, %38 : vector<128x1xf32>
      %c0_31 = arith.constant 0 : index
      %c0_32 = arith.constant 0 : index
      %40 = vector.load %arg7[%c0_31, %c0_32] : memref<128x1xf32, #tpu.memory_space<vmem>>, vector<128x1xf32>
      tpu.vector_store %arg7[%c0_31, %c0_32], %39 {strides = array<i32>} : memref<128x1xf32, #tpu.memory_space<vmem>>, vector<128x1xf32>,
    } else {
    }
    return
  }
  func.func @transform_0(%arg0: i32, %arg1: i32) -> (i32, i32) {
    %c0_i32 = arith.constant 0 : i32
    %c0_i32_0 = arith.constant 0 : i32
    return %arg0, %c0_i32 : i32, i32
  }
  func.func @transform_1(%arg0: i32, %arg1: i32) -> (i32, i32) {
    %c0_i32 = arith.constant 0 : i32
    %c0_i32_0 = arith.constant 0 : i32
    return %c0_i32, %arg1 : i32, i32
  }
  func.func @transform_2(%arg0: i32, %arg1: i32) -> (i32, i32) {
    %c0_i32 = arith.constant 0 : i32
    %c0_i32_0 = arith.constant 0 : i32
    return %c0_i32, %arg1 : i32, i32
  }
  func.func @transform_3(%arg0: i32, %arg1: i32) -> (i32, i32) {
    %c0_i32 = arith.constant 0 : i32
    %c0_i32_0 = arith.constant 0 : i32
    return %arg0, %c0_i32 : i32, i32
  }
  func.func @transform_4(%arg0: i32, %arg1: i32) -> (i32, i32) {
    %c0_i32 = arith.constant 0 : i32
    %c0_i32_0 = arith.constant 0 : i32
    return %c0_i32, %arg1 : i32, i32
  }
  func.func @transform_5(%arg0: i32, %arg1: i32) -> (i32, i32) {
    %c0_i32 = arith.constant 0 : i32
    %c0_i32_0 = arith.constant 0 : i32
    return %arg0, %c0_i32 : i32, i32
  }
}

</mosaic_0001>

<llo_original>
// kernel: tpu_custom_call.1
$region0: #{tpu_custom_call.1}
  #allocation0 [shape = 'u32[]', space=smem, size = 0x4, offset = 0x4, fixed_abs, tag = 'smem constant byte address 0x4 - core index']
  #allocation1 [shape = 'u32[144,128]{1,0:T(1,128)}', space=vmem, size = 0x12000, scoped, tag = 'internal scratch']
  #allocation2 [shape = 'f32[128,128]{1,0:T(8,128)}', space=vmem, size = 0x10000, scoped, tag = 'scratch operand']
  #allocation3 [shape = 'f32[128,128]{1,0:T(8,128)}', space=vmem, size = 0x10000, scoped, tag = 'scratch operand']
  %s0 = inlined_call_operand.vmem [shape: bf16[128,128], index: 0, kind: input, shape index: {}]
  %s1 = inlined_call_operand.vmem [shape: bf16[128,128], index: 1, kind: input, shape index: {}]
  %s2 = inlined_call_operand.vmem [shape: f32[1,128], index: 2, kind: input, shape index: {}]
  %s3 = inlined_call_operand.vmem [shape: s32[128,1], index: 3, kind: input, shape index: {}]
  %s4 = inlined_call_operand.vmem [shape: s32[1,128], index: 4, kind: input, shape index: {}]
  %s5 = inlined_call_operand.vmem [shape: f32[128,1], index: 5, kind: output, shape index: {}]
  %s6 = sld [smem:[#allocation0]]
  $region38: #{tpu_custom_call.1} parent=0
    _
  %s8 = ssub.s32 1, %s6
  %s9 = scalar_select 0, %s8, %s6
  // Predicated region
  $region2: #{tpu_custom_call.1} parent=0 // pred_check
    _
  $region3: #{tpu_custom_call.1} parent=0 // pred_check_branch
    %11 = sbr.rel (0) target = $region5
  $region4: #{tpu_custom_call.1} parent=0 // pred_region
    _
  $region5: #{tpu_custom_call.1} parent=0 // pred_fallthru
    _
  // Predicated region
  $region6: #{tpu_custom_call.1} parent=0 // pred_check
    _
  $region7: #{tpu_custom_call.1} parent=0 // pred_check_branch
    %13 = sbr.rel (0) target = $region9
  $region8: #{tpu_custom_call.1} parent=0 // pred_region
    _
  $region9: #{tpu_custom_call.1} parent=0 // pred_fallthru
    _
  // Predicated region
  $region10: #{tpu_custom_call.1} parent=0 // pred_check
    _
  $region11: #{tpu_custom_call.1} parent=0 // pred_check_branch
    %15 = sbr.rel (0) target = $region13
  $region12: #{tpu_custom_call.1} parent=0 // pred_region
    _
  $region13: #{tpu_custom_call.1} parent=0 // pred_fallthru
    _
  // Predicated region
  $region14: #{tpu_custom_call.1} parent=0 // pred_check
    _
  $region15: #{tpu_custom_call.1} parent=0 // pred_check_branch
    %17 = sbr.rel (0) target = $region17
  $region16: #{tpu_custom_call.1} parent=0 // pred_region
    _
  $region17: #{tpu_custom_call.1} parent=0 // pred_fallthru
    _
  // Predicated region
  $region18: #{tpu_custom_call.1} parent=0 // pred_check
    _
  $region19: #{tpu_custom_call.1} parent=0 // pred_check_branch
    %19 = sbr.rel (0) target = $region21
  $region20: #{tpu_custom_call.1} parent=0 // pred_region
    _
  $region21: #{tpu_custom_call.1} parent=0 // pred_fallthru
    _
  %p21 = scmp.eq.s32.totalorder 0, 0
  // Predicated region
  $region22: #{tpu_custom_call.1} parent=0 // pred_check
    %p22 = pneg %p21
  $region23: #{tpu_custom_call.1} parent=0 // pred_check_branch
    %24 = sbr.rel (%p22) target = $region25
  $region24: #{tpu_custom_call.1} parent=0 // pred_region
    %25 = vst [vmem:[#allocation2] sm:$0xff] -inf
    %26 = vst [vmem:[#allocation2 + $0x8] sm:$0xff] -inf
    %27 = vst [vmem:[#allocation2 + $0x10] sm:$0xff] -inf
    %28 = vst [vmem:[#allocation2 + $0x18] sm:$0xff] -inf
    %29 = vst [vmem:[#allocation2 + $0x20] sm:$0xff] -inf
    %30 = vst [vmem:[#allocation2 + $0x28] sm:$0xff] -inf
    %31 = vst [vmem:[#allocation2 + $0x30] sm:$0xff] -inf
    %32 = vst [vmem:[#allocation2 + $0x38] sm:$0xff] -inf
    %33 = vst [vmem:[#allocation2 + $0x40] sm:$0xff] -inf
    %34 = vst [vmem:[#allocation2 + $0x48] sm:$0xff] -inf
    %35 = vst [vmem:[#allocation2 + $0x50] sm:$0xff] -inf
    %36 = vst [vmem:[#allocation2 + $0x58] sm:$0xff] -inf
    %37 = vst [vmem:[#allocation2 + $0x60] sm:$0xff] -inf
    %38 = vst [vmem:[#allocation2 + $0x68] sm:$0xff] -inf
    %39 = vst [vmem:[#allocation2 + $0x70] sm:$0xff] -inf
    %40 = vst [vmem:[#allocation2 + $0x78] sm:$0xff] -inf
    %41 = vst [vmem:[#allocation3] sm:$0xff] inf
    %42 = vst [vmem:[#allocation3 + $0x8] sm:$0xff] inf
    %43 = vst [vmem:[#allocation3 + $0x10] sm:$0xff] inf
    %44 = vst [vmem:[#allocation3 + $0x18] sm:$0xff] inf
    %45 = vst [vmem:[#allocation3 + $0x20] sm:$0xff] inf
    %46 = vst [vmem:[#allocation3 + $0x28] sm:$0xff] inf
    %47 = vst [vmem:[#allocation3 + $0x30] sm:$0xff] inf
    %48 = vst [vmem:[#allocation3 + $0x38] sm:$0xff] inf
    %49 = vst [vmem:[#allocation3 + $0x40] sm:$0xff] inf
    %50 = vst [vmem:[#allocation3 + $0x48] sm:$0xff] inf
    %51 = vst [vmem:[#allocation3 + $0x50] sm:$0xff] inf
    %52 = vst [vmem:[#allocation3 + $0x58] sm:$0xff] inf
    %53 = vst [vmem:[#allocation3 + $0x60] sm:$0xff] inf
    %54 = vst [vmem:[#allocation3 + $0x68] sm:$0xff] inf
    %55 = vst [vmem:[#allocation3 + $0x70] sm:$0xff] inf
    %56 = vst [vmem:[#allocation3 + $0x78] sm:$0xff] inf
  $region25: #{tpu_custom_call.1} parent=0 // pred_fallthru
    _
  %v57 = vld [vmem:[%s0] sm:$0xf]
  %v58 = vld [vmem:[%s0 + $0x4] sm:$0xf]
  %v59 = vld [vmem:[%s0 + $0x8] sm:$0xf]
  %v60 = vld [vmem:[%s0 + $0xc] sm:$0xf]
  %v61 = vld [vmem:[%s0 + $0x10] sm:$0xf]
  %v62 = vld [vmem:[%s0 + $0x14] sm:$0xf]
  %v63 = vld [vmem:[%s0 + $0x18] sm:$0xf]
  %v64 = vld [vmem:[%s0 + $0x1c] sm:$0xf]
  %v65 = vld [vmem:[%s0 + $0x20] sm:$0xf]
  %v66 = vld [vmem:[%s0 + $0x24] sm:$0xf]
  %v67 = vld [vmem:[%s0 + $0x28] sm:$0xf]
  %v68 = vld [vmem:[%s0 + $0x2c] sm:$0xf]
  %v69 = vld [vmem:[%s0 + $0x30] sm:$0xf]
  %v70 = vld [vmem:[%s0 + $0x34] sm:$0xf]
  %v71 = vld [vmem:[%s0 + $0x38] sm:$0xf]
  %v72 = vld [vmem:[%s0 + $0x3c] sm:$0xf]
  %v73 = vld [vmem:[%s1] sm:$0xf]
  %v74 = vld [vmem:[%s1 + $0x4] sm:$0xf]
  %v75 = vld [vmem:[%s1 + $0x8] sm:$0xf]
  %v76 = vld [vmem:[%s1 + $0xc] sm:$0xf]
  %v77 = vld [vmem:[%s1 + $0x10] sm:$0xf]
  %v78 = vld [vmem:[%s1 + $0x14] sm:$0xf]
  %v79 = vld [vmem:[%s1 + $0x18] sm:$0xf]
  %v80 = vld [vmem:[%s1 + $0x1c] sm:$0xf]
  %v81 = vld [vmem:[%s1 + $0x20] sm:$0xf]
  %v82 = vld [vmem:[%s1 + $0x24] sm:$0xf]
  %v83 = vld [vmem:[%s1 + $0x28] sm:$0xf]
  %v84 = vld [vmem:[%s1 + $0x2c] sm:$0xf]
  %v85 = vld [vmem:[%s1 + $0x30] sm:$0xf]
  %v86 = vld [vmem:[%s1 + $0x34] sm:$0xf]
  %v87 = vld [vmem:[%s1 + $0x38] sm:$0xf]
  %v88 = vld [vmem:[%s1 + $0x3c] sm:$0xf]
  %v105 = vunpack.c.l.b16 %v57
  %v106 = vunpack.c.l.b16 %v58
  %v107 = vunpack.c.l.b16 %v59
  %v108 = vunpack.c.l.b16 %v60
  %v109 = vunpack.c.l.b16 %v61
  %v110 = vunpack.c.l.b16 %v62
  %v111 = vunpack.c.l.b16 %v63
  %v112 = vunpack.c.l.b16 %v64
  %v113 = vunpack.c.l.b16 %v65
  %v114 = vunpack.c.l.b16 %v66
  %v115 = vunpack.c.l.b16 %v67
  %v116 = vunpack.c.l.b16 %v68
  %v117 = vunpack.c.l.b16 %v69
  %v118 = vunpack.c.l.b16 %v70
  %v119 = vunpack.c.l.b16 %v71
  %v120 = vunpack.c.l.b16 %v72
  %v121 = vpack.c.b16 %v106, %v105
  %v122 = vpack.c.b16 %v108, %v107
  %v123 = vpack.c.b16 %v110, %v109
  %v124 = vpack.c.b16 %v112, %v111
  %v125 = vpack.c.b16 %v114, %v113
  %v126 = vpack.c.b16 %v116, %v115
  %v127 = vpack.c.b16 %v118, %v117
  %v128 = vpack.c.b16 %v120, %v119
  %v153 = vunpack.c.l.b16 %v73
  %v154 = vunpack.c.l.b16 %v74
  %v155 = vunpack.c.l.b16 %v75
  %v156 = vunpack.c.l.b16 %v76
  %v157 = vunpack.c.l.b16 %v77
  %v158 = vunpack.c.l.b16 %v78
  %v159 = vunpack.c.l.b16 %v79
  %v160 = vunpack.c.l.b16 %v80
  %v161 = vunpack.c.l.b16 %v81
  %v162 = vunpack.c.l.b16 %v82
  %v163 = vunpack.c.l.b16 %v83
  %v164 = vunpack.c.l.b16 %v84
  %v165 = vunpack.c.l.b16 %v85
  %v166 = vunpack.c.l.b16 %v86
  %v167 = vunpack.c.l.b16 %v87
  %v168 = vunpack.c.l.b16 %v88
  %v169 = vpack.c.b16 %v154, %v153
  %v170 = vpack.c.b16 %v156, %v155
  %v171 = vpack.c.b16 %v158, %v157
  %v172 = vpack.c.b16 %v160, %v159
  %v173 = vpack.c.b16 %v162, %v161
  %v174 = vpack.c.b16 %v164, %v163
  %v175 = vpack.c.b16 %v166, %v165
  %v176 = vpack.c.b16 %v168, %v167
  %185 = vmatprep.subr.bf16.mxu0 0
  %186 = vmatpush1.bf16.msra.mxu0 %v169
  %187 = vmatprep.subr.bf16.mxu0 0
  %188 = vmatpush1.bf16.msra.mxu0 %v170
  %189 = vmatprep.subr.bf16.mxu0 0
  %190 = vmatpush1.bf16.msra.mxu0 %v171
  %191 = vmatprep.subr.bf16.mxu0 0
  %192 = vmatpush1.bf16.msra.mxu0 %v172
  %193 = vmatprep.subr.bf16.mxu0 0
  %194 = vmatpush1.bf16.msra.mxu0 %v173
  %195 = vmatprep.subr.bf16.mxu0 0
  %196 = vmatpush1.bf16.msra.mxu0 %v174
  %197 = vmatprep.subr.bf16.mxu0 0
  %198 = vmatpush1.bf16.msra.mxu0 %v175
  %199 = vmatprep.subr.bf16.mxu0 0
  %200 = vmatpush1.bf16.msra.mxu0 %v176
  %201 = vmatprep.subr.bf16.mxu0 0
  %202 = vmatpush1.bf16.msra.mxu0 0
  %203 = vmatprep.subr.bf16.mxu0 0
  %204 = vmatpush1.bf16.msra.mxu0 0
  %205 = vmatprep.subr.bf16.mxu0 0
  %206 = vmatpush1.bf16.msra.mxu0 0
  %207 = vmatprep.subr.bf16.mxu0 0
  %208 = vmatpush1.bf16.msra.mxu0 0
  %209 = vmatprep.subr.bf16.mxu0 0
  %210 = vmatpush1.bf16.msra.mxu0 0
  %211 = vmatprep.subr.bf16.mxu0 0
  %212 = vmatpush1.bf16.msra.mxu0 0
  %213 = vmatprep.subr.bf16.mxu0 0
  %214 = vmatpush1.bf16.msra.mxu0 0
  %215 = vmatprep.subr.bf16.mxu0 0
  %216 = vmatpush1.bf16.msra.mxu0 0
  %217 = vmatprep.mubr.bf16.mxu0 0
  %218 = vmatmul.mubr.bf16.gmra.mrb[0].mxu0 %v121
  %v219 = vpop.f32.mrb[0].mxu0
  %v220 = vadd.f32 0.0, %v219
  %v221 = vpop.f32.mrb[0].mxu0
  %v222 = vpop.f32.mrb[0].mxu0
  %v223 = vadd.f32 0.0, %v222
  %v224 = vpop.f32.mrb[0].mxu0
  %225 = vmatprep.mubr.bf16.mxu0 0
  %226 = vmatmul.mubr.bf16.gmra.mrb[0].mxu0 %v122
  %v227 = vpop.f32.mrb[0].mxu0
  %v228 = vadd.f32 0.0, %v227
  %v229 = vpop.f32.mrb[0].mxu0
  %v230 = vpop.f32.mrb[0].mxu0
  %v231 = vadd.f32 0.0, %v230
  %v232 = vpop.f32.mrb[0].mxu0
  %233 = vmatprep.mubr.bf16.mxu0 0
  %234 = vmatmul.mubr.bf16.gmra.mrb[0].mxu0 %v123
  %v235 = vpop.f32.mrb[0].mxu0
  %v236 = vadd.f32 0.0, %v235
  %v237 = vpop.f32.mrb[0].mxu0
  %v238 = vpop.f32.mrb[0].mxu0
  %v239 = vadd.f32 0.0, %v238
  %v240 = vpop.f32.mrb[0].mxu0
  %241 = vmatprep.mubr.bf16.mxu0 0
  %242 = vmatmul.mubr.bf16.gmra.mrb[0].mxu0 %v124
  %v243 = vpop.f32.mrb[0].mxu0
  %v244 = vadd.f32 0.0, %v243
  %v245 = vpop.f32.mrb[0].mxu0
  %v246 = vpop.f32.mrb[0].mxu0
  %v247 = vadd.f32 0.0, %v246
  %v248 = vpop.f32.mrb[0].mxu0
  %249 = vmatprep.mubr.bf16.mxu0 0
  %250 = vmatmul.mubr.bf16.gmra.mrb[0].mxu0 %v125
  %v251 = vpop.f32.mrb[0].mxu0
  %v252 = vadd.f32 0.0, %v251
  %v253 = vpop.f32.mrb[0].mxu0
  %v254 = vpop.f32.mrb[0].mxu0
  %v255 = vadd.f32 0.0, %v254
  %v256 = vpop.f32.mrb[0].mxu0
  %257 = vmatprep.mubr.bf16.mxu0 0
  %258 = vmatmul.mubr.bf16.gmra.mrb[0].mxu0 %v126
  %v259 = vpop.f32.mrb[0].mxu0
  %v260 = vadd.f32 0.0, %v259
  %v261 = vpop.f32.mrb[0].mxu0
  %v262 = vpop.f32.mrb[0].mxu0
  %v263 = vadd.f32 0.0, %v262
  %v264 = vpop.f32.mrb[0].mxu0
  %265 = vmatprep.mubr.bf16.mxu0 0
  %266 = vmatmul.mubr.bf16.gmra.mrb[0].mxu0 %v127
  %v267 = vpop.f32.mrb[0].mxu0
  %v268 = vadd.f32 0.0, %v267
  %v269 = vpop.f32.mrb[0].mxu0
  %v270 = vpop.f32.mrb[0].mxu0
  %v271 = vadd.f32 0.0, %v270
  %v272 = vpop.f32.mrb[0].mxu0
  %273 = vmatprep.mubr.bf16.mxu0 0
  %274 = vmatmul.mubr.bf16.gmra.mrb[0].mxu0 %v128
  %v275 = vpop.f32.mrb[0].mxu0
  %v276 = vadd.f32 0.0, %v275
  %v277 = vpop.f32.mrb[0].mxu0
  %v278 = vpop.f32.mrb[0].mxu0
  %v279 = vadd.f32 0.0, %v278
  %v280 = vpop.f32.mrb[0].mxu0
  %281 = vdwg.mxu0
  %v282 = vld [vmem:[%s2] sm:$0x1]
  %v284 = vlaneseq
  %v285 = vshrl.u32 %v284, 7
  %v286 = vsub.s32 0, %v285
  %v287 = vrot.slane %v282, %v286
  %v289 = vsub.f32 %v287, %v220
  %v290 = vsub.f32 %v287, %v223
  %v291 = vsub.f32 %v287, %v228
  %v292 = vsub.f32 %v287, %v231
  %v293 = vsub.f32 %v287, %v236
  %v294 = vsub.f32 %v287, %v239
  %v295 = vsub.f32 %v287, %v244
  %v296 = vsub.f32 %v287, %v247
  %v297 = vsub.f32 %v287, %v252
  %v298 = vsub.f32 %v287, %v255
  %v299 = vsub.f32 %v287, %v260
  %v300 = vsub.f32 %v287, %v263
  %v301 = vsub.f32 %v287, %v268
  %v302 = vsub.f32 %v287, %v271
  %v303 = vsub.f32 %v287, %v276
  %v304 = vsub.f32 %v287, %v279
  %v305 = vld [vmem:[%s3] sm:$0xff]
  %v306 = vld [vmem:[%s3 + $0x8] sm:$0xff]
  %v307 = vld [vmem:[%s3 + $0x10] sm:$0xff]
  %v308 = vld [vmem:[%s3 + $0x18] sm:$0xff]
  %v309 = vld [vmem:[%s3 + $0x20] sm:$0xff]
  %v310 = vld [vmem:[%s3 + $0x28] sm:$0xff]
  %v311 = vld [vmem:[%s3 + $0x30] sm:$0xff]
  %v312 = vld [vmem:[%s3 + $0x38] sm:$0xff]
  %v313 = vld [vmem:[%s3 + $0x40] sm:$0xff]
  %v314 = vld [vmem:[%s3 + $0x48] sm:$0xff]
  %v315 = vld [vmem:[%s3 + $0x50] sm:$0xff]
  %v316 = vld [vmem:[%s3 + $0x58] sm:$0xff]
  %v317 = vld [vmem:[%s3 + $0x60] sm:$0xff]
  %v318 = vld [vmem:[%s3 + $0x68] sm:$0xff]
  %v319 = vld [vmem:[%s3 + $0x70] sm:$0xff]
  %v320 = vld [vmem:[%s3 + $0x78] sm:$0xff]
  %v321 = vld [vmem:[%s4] sm:$0x1]
  %322 = vset.pattern.permute.xlu0 0
  %323 = vperm.xlu0 %322, %v305
  %v324 = vpop.permute.xlu0 %323
  %325 = vset.pattern.permute.xlu0 0
  %326 = vperm.xlu0 %325, %v306
  %v327 = vpop.permute.xlu0 %326
  %328 = vset.pattern.permute.xlu0 0
  %329 = vperm.xlu0 %328, %v307
  %v330 = vpop.permute.xlu0 %329
  %331 = vset.pattern.permute.xlu0 0
  %332 = vperm.xlu0 %331, %v308
  %v333 = vpop.permute.xlu0 %332
  %334 = vset.pattern.permute.xlu0 0
  %335 = vperm.xlu0 %334, %v309
  %v336 = vpop.permute.xlu0 %335
  %337 = vset.pattern.permute.xlu0 0
  %338 = vperm.xlu0 %337, %v310
  %v339 = vpop.permute.xlu0 %338
  %340 = vset.pattern.permute.xlu0 0
  %341 = vperm.xlu0 %340, %v311
  %v342 = vpop.permute.xlu0 %341
  %343 = vset.pattern.permute.xlu0 0
  %344 = vperm.xlu0 %343, %v312
  %v345 = vpop.permute.xlu0 %344
  %346 = vset.pattern.permute.xlu0 0
  %347 = vperm.xlu0 %346, %v313
  %v348 = vpop.permute.xlu0 %347
  %349 = vset.pattern.permute.xlu0 0
  %350 = vperm.xlu0 %349, %v314
  %v351 = vpop.permute.xlu0 %350
  %352 = vset.pattern.permute.xlu0 0
  %353 = vperm.xlu0 %352, %v315
  %v354 = vpop.permute.xlu0 %353
  %355 = vset.pattern.permute.xlu0 0
  %356 = vperm.xlu0 %355, %v316
  %v357 = vpop.permute.xlu0 %356
  %358 = vset.pattern.permute.xlu0 0
  %359 = vperm.xlu0 %358, %v317
  %v360 = vpop.permute.xlu0 %359
  %361 = vset.pattern.permute.xlu0 0
  %362 = vperm.xlu0 %361, %v318
  %v363 = vpop.permute.xlu0 %362
  %364 = vset.pattern.permute.xlu0 0
  %365 = vperm.xlu0 %364, %v319
  %v366 = vpop.permute.xlu0 %365
  %367 = vset.pattern.permute.xlu0 0
  %368 = vperm.xlu0 %367, %v320
  %v369 = vpop.permute.xlu0 %368
  %v370 = vlaneseq
  %v371 = vshrl.u32 %v370, 7
  %v372 = vsub.s32 0, %v371
  %v373 = vrot.slane %v321, %v372
  %vm374 = vcmp.eq.s32.totalorder %v324, %v373
  %vm375 = vcmp.eq.s32.totalorder %v327, %v373
  %vm376 = vcmp.eq.s32.totalorder %v330, %v373
  %vm377 = vcmp.eq.s32.totalorder %v333, %v373
  %vm378 = vcmp.eq.s32.totalorder %v336, %v373
  %vm379 = vcmp.eq.s32.totalorder %v339, %v373
  %vm380 = vcmp.eq.s32.totalorder %v342, %v373
  %vm381 = vcmp.eq.s32.totalorder %v345, %v373
  %vm382 = vcmp.eq.s32.totalorder %v348, %v373
  %vm383 = vcmp.eq.s32.totalorder %v351, %v373
  %vm384 = vcmp.eq.s32.totalorder %v354, %v373
  %vm385 = vcmp.eq.s32.totalorder %v357, %v373
  %vm386 = vcmp.eq.s32.totalorder %v360, %v373
  %vm387 = vcmp.eq.s32.totalorder %v363, %v373
  %vm388 = vcmp.eq.s32.totalorder %v366, %v373
  %vm389 = vcmp.eq.s32.totalorder %v369, %v373
  %v390 = vsel %vm374, %v289, -inf
  %v391 = vsel %vm375, %v290, -inf
  %v392 = vsel %vm376, %v291, -inf
  %v393 = vsel %vm377, %v292, -inf
  %v394 = vsel %vm378, %v293, -inf
  %v395 = vsel %vm379, %v294, -inf
  %v396 = vsel %vm380, %v295, -inf
  %v397 = vsel %vm381, %v296, -inf
  %v398 = vsel %vm382, %v297, -inf
  %v399 = vsel %vm383, %v298, -inf
  %v400 = vsel %vm384, %v299, -inf
  %v401 = vsel %vm385, %v300, -inf
  %v402 = vsel %vm386, %v301, -inf
  %v403 = vsel %vm387, %v302, -inf
  %v404 = vsel %vm388, %v303, -inf
  %v405 = vsel %vm389, %v304, -inf
  %v406 = vsel %vm374, inf, %v289
  %v407 = vsel %vm375, inf, %v290
  %v408 = vsel %vm376, inf, %v291
  %v409 = vsel %vm377, inf, %v292
  %v410 = vsel %vm378, inf, %v293
  %v411 = vsel %vm379, inf, %v294
  %v412 = vsel %vm380, inf, %v295
  %v413 = vsel %vm381, inf, %v296
  %v414 = vsel %vm382, inf, %v297
  %v415 = vsel %vm383, inf, %v298
  %v416 = vsel %vm384, inf, %v299
  %v417 = vsel %vm385, inf, %v300
  %v418 = vsel %vm386, inf, %v301
  %v419 = vsel %vm387, inf, %v302
  %v420 = vsel %vm388, inf, %v303
  %v421 = vsel %vm389, inf, %v304
  %v422 = vld [vmem:[#allocation2] sm:$0xff]
  %v423 = vld [vmem:[#allocation2 + $0x8] sm:$0xff]
  %v424 = vld [vmem:[#allocation2 + $0x10] sm:$0xff]
  %v425 = vld [vmem:[#allocation2 + $0x18] sm:$0xff]
  %v426 = vld [vmem:[#allocation2 + $0x20] sm:$0xff]
  %v427 = vld [vmem:[#allocation2 + $0x28] sm:$0xff]
  %v428 = vld [vmem:[#allocation2 + $0x30] sm:$0xff]
  %v429 = vld [vmem:[#allocation2 + $0x38] sm:$0xff]
  %v430 = vld [vmem:[#allocation2 + $0x40] sm:$0xff]
  %v431 = vld [vmem:[#allocation2 + $0x48] sm:$0xff]
  %v432 = vld [vmem:[#allocation2 + $0x50] sm:$0xff]
  %v433 = vld [vmem:[#allocation2 + $0x58] sm:$0xff]
  %v434 = vld [vmem:[#allocation2 + $0x60] sm:$0xff]
  %v435 = vld [vmem:[#allocation2 + $0x68] sm:$0xff]
  %v436 = vld [vmem:[#allocation2 + $0x70] sm:$0xff]
  %v437 = vld [vmem:[#allocation2 + $0x78] sm:$0xff]
  %v438 = vld [vmem:[#allocation3] sm:$0xff]
  %v439 = vld [vmem:[#allocation3 + $0x8] sm:$0xff]
  %v440 = vld [vmem:[#allocation3 + $0x10] sm:$0xff]
  %v441 = vld [vmem:[#allocation3 + $0x18] sm:$0xff]
  %v442 = vld [vmem:[#allocation3 + $0x20] sm:$0xff]
  %v443 = vld [vmem:[#allocation3 + $0x28] sm:$0xff]
  %v444 = vld [vmem:[#allocation3 + $0x30] sm:$0xff]
  %v445 = vld [vmem:[#allocation3 + $0x38] sm:$0xff]
  %v446 = vld [vmem:[#allocation3 + $0x40] sm:$0xff]
  %v447 = vld [vmem:[#allocation3 + $0x48] sm:$0xff]
  %v448 = vld [vmem:[#allocation3 + $0x50] sm:$0xff]
  %v449 = vld [vmem:[#allocation3 + $0x58] sm:$0xff]
  %v450 = vld [vmem:[#allocation3 + $0x60] sm:$0xff]
  %v451 = vld [vmem:[#allocation3 + $0x68] sm:$0xff]
  %v452 = vld [vmem:[#allocation3 + $0x70] sm:$0xff]
  %v453 = vld [vmem:[#allocation3 + $0x78] sm:$0xff]
  %v454 = vmax.f32 %v422, %v390
  %v455 = vmax.f32 %v423, %v391
  %v456 = vmax.f32 %v424, %v392
  %v457 = vmax.f32 %v425, %v393
  %v458 = vmax.f32 %v426, %v394
  %v459 = vmax.f32 %v427, %v395
  %v460 = vmax.f32 %v428, %v396
  %v461 = vmax.f32 %v429, %v397
  %v462 = vmax.f32 %v430, %v398
  %v463 = vmax.f32 %v431, %v399
  %v464 = vmax.f32 %v432, %v400
  %v465 = vmax.f32 %v433, %v401
  %v466 = vmax.f32 %v434, %v402
  %v467 = vmax.f32 %v435, %v403
  %v468 = vmax.f32 %v436, %v404
  %v469 = vmax.f32 %v437, %v405
  %v470 = vmin.f32 %v438, %v406
  %v471 = vmin.f32 %v439, %v407
  %v472 = vmin.f32 %v440, %v408
  %v473 = vmin.f32 %v441, %v409
  %v474 = vmin.f32 %v442, %v410
  %v475 = vmin.f32 %v443, %v411
  %v476 = vmin.f32 %v444, %v412
  %v477 = vmin.f32 %v445, %v413
  %v478 = vmin.f32 %v446, %v414
  %v479 = vmin.f32 %v447, %v415
  %v480 = vmin.f32 %v448, %v416
  %v481 = vmin.f32 %v449, %v417
  %v482 = vmin.f32 %v450, %v418
  %v483 = vmin.f32 %v451, %v419
  %v484 = vmin.f32 %v452, %v420
  %v485 = vmin.f32 %v453, %v421
  %486 = vst [vmem:[#allocation2] sm:$0xff] %v454
  %487 = vst [vmem:[#allocation2 + $0x8] sm:$0xff] %v455
  %488 = vst [vmem:[#allocation2 + $0x10] sm:$0xff] %v456
  %489 = vst [vmem:[#allocation2 + $0x18] sm:$0xff] %v457
  %490 = vst [vmem:[#allocation2 + $0x20] sm:$0xff] %v458
  %491 = vst [vmem:[#allocation2 + $0x28] sm:$0xff] %v459
  %492 = vst [vmem:[#allocation2 + $0x30] sm:$0xff] %v460
  %493 = vst [vmem:[#allocation2 + $0x38] sm:$0xff] %v461
  %494 = vst [vmem:[#allocation2 + $0x40] sm:$0xff] %v462
  %495 = vst [vmem:[#allocation2 + $0x48] sm:$0xff] %v463
  %496 = vst [vmem:[#allocation2 + $0x50] sm:$0xff] %v464
  %497 = vst [vmem:[#allocation2 + $0x58] sm:$0xff] %v465
  %498 = vst [vmem:[#allocation2 + $0x60] sm:$0xff] %v466
  %499 = vst [vmem:[#allocation2 + $0x68] sm:$0xff] %v467
  %500 = vst [vmem:[#allocation2 + $0x70] sm:$0xff] %v468
  %501 = vst [vmem:[#allocation2 + $0x78] sm:$0xff] %v469
  %502 = vst [vmem:[#allocation3] sm:$0xff] %v470
  %503 = vst [vmem:[#allocation3 + $0x8] sm:$0xff] %v471
  %504 = vst [vmem:[#allocation3 + $0x10] sm:$0xff] %v472
  %505 = vst [vmem:[#allocation3 + $0x18] sm:$0xff] %v473
  %506 = vst [vmem:[#allocation3 + $0x20] sm:$0xff] %v474
  %507 = vst [vmem:[#allocation3 + $0x28] sm:$0xff] %v475
  %508 = vst [vmem:[#allocation3 + $0x30] sm:$0xff] %v476
  %509 = vst [vmem:[#allocation3 + $0x38] sm:$0xff] %v477
  %510 = vst [vmem:[#allocation3 + $0x40] sm:$0xff] %v478
  %511 = vst [vmem:[#allocation3 + $0x48] sm:$0xff] %v479
  %512 = vst [vmem:[#allocation3 + $0x50] sm:$0xff] %v480
  %513 = vst [vmem:[#allocation3 + $0x58] sm:$0xff] %v481
  %514 = vst [vmem:[#allocation3 + $0x60] sm:$0xff] %v482
  %515 = vst [vmem:[#allocation3 + $0x68] sm:$0xff] %v483
  %516 = vst [vmem:[#allocation3 + $0x70] sm:$0xff] %v484
  %517 = vst [vmem:[#allocation3 + $0x78] sm:$0xff] %v485
  // Predicated region
  $region26: #{tpu_custom_call.1} parent=0 // pred_check
    %p518 = pneg %p21
  $region27: #{tpu_custom_call.1} parent=0 // pred_check_branch
    %520 = sbr.rel (%p518) target = $region29
  $region28: #{tpu_custom_call.1} parent=0 // pred_region
    %v521 = vld [vmem:[#allocation2] sm:$0xff]
    %v522 = vld [vmem:[#allocation2 + $0x8] sm:$0xff]
    %v523 = vld [vmem:[#allocation2 + $0x10] sm:$0xff]
    %v524 = vld [vmem:[#allocation2 + $0x18] sm:$0xff]
    %v525 = vld [vmem:[#allocation2 + $0x20] sm:$0xff]
    %v526 = vld [vmem:[#allocation2 + $0x28] sm:$0xff]
    %v527 = vld [vmem:[#allocation2 + $0x30] sm:$0xff]
    %v528 = vld [vmem:[#allocation2 + $0x38] sm:$0xff]
    %v529 = vld [vmem:[#allocation2 + $0x40] sm:$0xff]
    %v530 = vld [vmem:[#allocation2 + $0x48] sm:$0xff]
    %v531 = vld [vmem:[#allocation2 + $0x50] sm:$0xff]
    %v532 = vld [vmem:[#allocation2 + $0x58] sm:$0xff]
    %v533 = vld [vmem:[#allocation2 + $0x60] sm:$0xff]
    %v534 = vld [vmem:[#allocation2 + $0x68] sm:$0xff]
    %v535 = vld [vmem:[#allocation2 + $0x70] sm:$0xff]
    %v536 = vld [vmem:[#allocation2 + $0x78] sm:$0xff]
    %537 = vmax.xlane.f32.xlu0 %v521
    %v538 = vpop.xlane.xlu0 %537
    %539 = vmax.xlane.f32.xlu0 %v522
    %v540 = vpop.xlane.xlu0 %539
    %541 = vmax.xlane.f32.xlu0 %v523
    %v542 = vpop.xlane.xlu0 %541
    %543 = vmax.xlane.f32.xlu0 %v524
    %v544 = vpop.xlane.xlu0 %543
    %545 = vmax.xlane.f32.xlu0 %v525
    %v546 = vpop.xlane.xlu0 %545
    %547 = vmax.xlane.f32.xlu0 %v526
    %v548 = vpop.xlane.xlu0 %547
    %549 = vmax.xlane.f32.xlu0 %v527
    %v550 = vpop.xlane.xlu0 %549
    %551 = vmax.xlane.f32.xlu0 %v528
    %v552 = vpop.xlane.xlu0 %551
    %553 = vmax.xlane.f32.xlu0 %v529
    %v554 = vpop.xlane.xlu0 %553
    %555 = vmax.xlane.f32.xlu0 %v530
    %v556 = vpop.xlane.xlu0 %555
    %557 = vmax.xlane.f32.xlu0 %v531
    %v558 = vpop.xlane.xlu0 %557
    %559 = vmax.xlane.f32.xlu0 %v532
    %v560 = vpop.xlane.xlu0 %559
    %561 = vmax.xlane.f32.xlu0 %v533
    %v562 = vpop.xlane.xlu0 %561
    %563 = vmax.xlane.f32.xlu0 %v534
    %v564 = vpop.xlane.xlu0 %563
    %565 = vmax.xlane.f32.xlu0 %v535
    %v566 = vpop.xlane.xlu0 %565
    %567 = vmax.xlane.f32.xlu0 %v536
    %v568 = vpop.xlane.xlu0 %567
    %v569 = vld [vmem:[#allocation3] sm:$0xff]
    %v570 = vld [vmem:[#allocation3 + $0x8] sm:$0xff]
    %v571 = vld [vmem:[#allocation3 + $0x10] sm:$0xff]
    %v572 = vld [vmem:[#allocation3 + $0x18] sm:$0xff]
    %v573 = vld [vmem:[#allocation3 + $0x20] sm:$0xff]
    %v574 = vld [vmem:[#allocation3 + $0x28] sm:$0xff]
    %v575 = vld [vmem:[#allocation3 + $0x30] sm:$0xff]
    %v576 = vld [vmem:[#allocation3 + $0x38] sm:$0xff]
    %v577 = vld [vmem:[#allocation3 + $0x40] sm:$0xff]
    %v578 = vld [vmem:[#allocation3 + $0x48] sm:$0xff]
    %v579 = vld [vmem:[#allocation3 + $0x50] sm:$0xff]
    %v580 = vld [vmem:[#allocation3 + $0x58] sm:$0xff]
    %v581 = vld [vmem:[#allocation3 + $0x60] sm:$0xff]
    %v582 = vld [vmem:[#allocation3 + $0x68] sm:$0xff]
    %v583 = vld [vmem:[#allocation3 + $0x70] sm:$0xff]
    %v584 = vld [vmem:[#allocation3 + $0x78] sm:$0xff]
    %585 = vmin.xlane.f32.xlu0 %v569
    %v586 = vpop.xlane.xlu0 %585
    %587 = vmin.xlane.f32.xlu0 %v570
    %v588 = vpop.xlane.xlu0 %587
    %589 = vmin.xlane.f32.xlu0 %v571
    %v590 = vpop.xlane.xlu0 %589
    %591 = vmin.xlane.f32.xlu0 %v572
    %v592 = vpop.xlane.xlu0 %591
    %593 = vmin.xlane.f32.xlu0 %v573
    %v594 = vpop.xlane.xlu0 %593
    %595 = vmin.xlane.f32.xlu0 %v574
    %v596 = vpop.xlane.xlu0 %595
    %597 = vmin.xlane.f32.xlu0 %v575
    %v598 = vpop.xlane.xlu0 %597
    %599 = vmin.xlane.f32.xlu0 %v576
    %v600 = vpop.xlane.xlu0 %599
    %601 = vmin.xlane.f32.xlu0 %v577
    %v602 = vpop.xlane.xlu0 %601
    %603 = vmin.xlane.f32.xlu0 %v578
    %v604 = vpop.xlane.xlu0 %603
    %605 = vmin.xlane.f32.xlu0 %v579
    %v606 = vpop.xlane.xlu0 %605
    %607 = vmin.xlane.f32.xlu0 %v580
    %v608 = vpop.xlane.xlu0 %607
    %609 = vmin.xlane.f32.xlu0 %v581
    %v610 = vpop.xlane.xlu0 %609
    %611 = vmin.xlane.f32.xlu0 %v582
    %v612 = vpop.xlane.xlu0 %611
    %613 = vmin.xlane.f32.xlu0 %v583
    %v614 = vpop.xlane.xlu0 %613
    %615 = vmin.xlane.f32.xlu0 %v584
    %v616 = vpop.xlane.xlu0 %615
    %v617 = vsub.f32 %v538, %v586
    %v618 = vsub.f32 %v540, %v588
    %v619 = vsub.f32 %v542, %v590
    %v620 = vsub.f32 %v544, %v592
    %v621 = vsub.f32 %v546, %v594
    %v622 = vsub.f32 %v548, %v596
    %v623 = vsub.f32 %v550, %v598
    %v624 = vsub.f32 %v552, %v600
    %v625 = vsub.f32 %v554, %v602
    %v626 = vsub.f32 %v556, %v604
    %v627 = vsub.f32 %v558, %v606
    %v628 = vsub.f32 %v560, %v608
    %v629 = vsub.f32 %v562, %v610
    %v630 = vsub.f32 %v564, %v612
    %v631 = vsub.f32 %v566, %v614
    %v632 = vsub.f32 %v568, %v616
    %v633 = vmul.f32 %v617, 2.0
    %v634 = vmul.f32 %v618, 2.0
    %v635 = vmul.f32 %v619, 2.0
    %v636 = vmul.f32 %v620, 2.0
    %v637 = vmul.f32 %v621, 2.0
    %v638 = vmul.f32 %v622, 2.0
    %v639 = vmul.f32 %v623, 2.0
    %v640 = vmul.f32 %v624, 2.0
    %v641 = vmul.f32 %v625, 2.0
    %v642 = vmul.f32 %v626, 2.0
    %v643 = vmul.f32 %v627, 2.0
    %v644 = vmul.f32 %v628, 2.0
    %v645 = vmul.f32 %v629, 2.0
    %v646 = vmul.f32 %v630, 2.0
    %v647 = vmul.f32 %v631, 2.0
    %v648 = vmul.f32 %v632, 2.0
    %v649 = vadd.f32 %v633, 200.0
    %v650 = vadd.f32 %v634, 200.0
    %v651 = vadd.f32 %v635, 200.0
    %v652 = vadd.f32 %v636, 200.0
    %v653 = vadd.f32 %v637, 200.0
    %v654 = vadd.f32 %v638, 200.0
    %v655 = vadd.f32 %v639, 200.0
    %v656 = vadd.f32 %v640, 200.0
    %v657 = vadd.f32 %v641, 200.0
    %v658 = vadd.f32 %v642, 200.0
    %v659 = vadd.f32 %v643, 200.0
    %v660 = vadd.f32 %v644, 200.0
    %v661 = vadd.f32 %v645, 200.0
    %v662 = vadd.f32 %v646, 200.0
    %v663 = vadd.f32 %v647, 200.0
    %v664 = vadd.f32 %v648, 200.0
    %v665 = vmax.f32 %v649, 0.0
    %v666 = vmax.f32 %v650, 0.0
    %v667 = vmax.f32 %v651, 0.0
    %v668 = vmax.f32 %v652, 0.0
    %v669 = vmax.f32 %v653, 0.0
    %v670 = vmax.f32 %v654, 0.0
    %v671 = vmax.f32 %v655, 0.0
    %v672 = vmax.f32 %v656, 0.0
    %v673 = vmax.f32 %v657, 0.0
    %v674 = vmax.f32 %v658, 0.0
    %v675 = vmax.f32 %v659, 0.0
    %v676 = vmax.f32 %v660, 0.0
    %v677 = vmax.f32 %v661, 0.0
    %v678 = vmax.f32 %v662, 0.0
    %v679 = vmax.f32 %v663, 0.0
    %v680 = vmax.f32 %v664, 0.0
    %vm681 = vcmask 7168
    %682 = vst.msk [vmem:[%s5] sm:$0xff] %vm681, %v665
    %683 = vst.msk [vmem:[%s5 + $0x8] sm:$0xff] %vm681, %v666
    %684 = vst.msk [vmem:[%s5 + $0x10] sm:$0xff] %vm681, %v667
    %685 = vst.msk [vmem:[%s5 + $0x18] sm:$0xff] %vm681, %v668
    %686 = vst.msk [vmem:[%s5 + $0x20] sm:$0xff] %vm681, %v669
    %687 = vst.msk [vmem:[%s5 + $0x28] sm:$0xff] %vm681, %v670
    %688 = vst.msk [vmem:[%s5 + $0x30] sm:$0xff] %vm681, %v671
    %689 = vst.msk [vmem:[%s5 + $0x38] sm:$0xff] %vm681, %v672
    %690 = vst.msk [vmem:[%s5 + $0x40] sm:$0xff] %vm681, %v673
    %691 = vst.msk [vmem:[%s5 + $0x48] sm:$0xff] %vm681, %v674
    %692 = vst.msk [vmem:[%s5 + $0x50] sm:$0xff] %vm681, %v675
    %693 = vst.msk [vmem:[%s5 + $0x58] sm:$0xff] %vm681, %v676
    %694 = vst.msk [vmem:[%s5 + $0x60] sm:$0xff] %vm681, %v677
    %695 = vst.msk [vmem:[%s5 + $0x68] sm:$0xff] %vm681, %v678
    %696 = vst.msk [vmem:[%s5 + $0x70] sm:$0xff] %vm681, %v679
    %697 = vst.msk [vmem:[%s5 + $0x78] sm:$0xff] %vm681, %v680
  $region29: #{tpu_custom_call.1} parent=0 // pred_fallthru
    _
  // Predicated region
  $region30: #{tpu_custom_call.1} parent=0 // pred_check
    _
  $region31: #{tpu_custom_call.1} parent=0 // pred_check_branch
    %699 = sbr.rel (0) target = $region33
  $region32: #{tpu_custom_call.1} parent=0 // pred_region
    _
  $region33: #{tpu_custom_call.1} parent=0 // pred_fallthru
    _
  // Predicated region
  $region34: #{tpu_custom_call.1} parent=0 // pred_check
    _
  $region35: #{tpu_custom_call.1} parent=0 // pred_check_branch
    %701 = sbr.rel (0) target = $region37
  $region36: #{tpu_custom_call.1} parent=0 // pred_region
    _
  $region37: #{tpu_custom_call.1} parent=0 // pred_fallthru
    _

</llo_original>
